<compile_context>
chip_gen: v6e
topology: v6e:2x2x1
jax: 0.10.0
libtpu: 0.0.40
codegen_flags: <defaults>
</compile_context>

<pallas_src>
import functools

import jax
import jax.numpy as jnp
from jax.experimental import pallas as pl
from jax.experimental.pallas import tpu as pltpu

LANE = 128
SUBLANE = 8


def _round_up(x, m):
    return (x + m - 1) // m * m


# ------------------------------- fused kernel -------------------------------

def sagraph_fused_kernel(x_ref, a_ref, w_ref, b_ref, out_ref, *, num_layers):
    """All layers of SAGraphV3 in one kernel (whole-array VMEM blocks).

    x_ref : (Np, Cp)       f32   node features, channel-padded to 128 lanes
    a_ref : (Np, Np)       bf16  aggregation matrix (layer-invariant)
    w_ref : (L, 2*Cp, Cp)  bf16  fused [W_self; W_neighbor], zero-padded
    b_ref : (L, 1, Cp)     f32   zero-padded biases
    """
    x = x_ref[...]                       # f32 working features
    a = a_ref[...]                       # bf16, reused by every layer
    for l in range(num_layers):          # static unroll, weights are tiny
        xb = x.astype(jnp.bfloat16)      # bf16 MXU operands, f32 accumulation
        # neighbor aggregation: (A @ x)[d] == sum_{e: dst=d} (x[src] - x[dst])
        agg = jnp.dot(a, xb, preferred_element_type=jnp.float32)
        # fused self + neighbor transform: [x | agg] @ [[W_self],[W_neighbor]]
        cat = jnp.concatenate([xb, agg.astype(jnp.bfloat16)], axis=-1)
        out = jnp.dot(cat, w_ref[l], preferred_element_type=jnp.float32) + b_ref[l]
        if l < num_layers - 1:
            out = jnp.maximum(out, 0.0)  # ReLU (dropout p=0 -> identity), f32 VPU
        x = out
    out_ref[...] = x.astype(out_ref.dtype)   # lane-dense (Cp = 128k) store


# --------------------------------- wrapper ----------------------------------

def sagraph_v3_forward(params, x, edge_index, aggregation='sum'):
    N, in_c = x.shape
    L = len(params)
    out_c = params[-1]['w_self'].shape[1]
    dims = [in_c] + [p['w_self'].shape[1] for p in params]
    c_pad = _round_up(max(dims), LANE)
    n_pad = _round_up(N, SUBLANE)

    src = edge_index[0].astype(jnp.int32)
    dst = edge_index[1].astype(jnp.int32)

    # Aggregation matrix, built once per graph (layer-invariant):
    #   A[d, s] += 1 for each edge s->d,  A[d, d] -= deg(d)
    # so (A @ x)[d] == sum_{e: dst[e]=d} (x[src[e]] - x[dst[e]]).
    A = jnp.zeros((n_pad, n_pad), jnp.float32)
    A = A.at[dst, src].add(1.0)
    A = A.at[dst, dst].add(-1.0)
    if aggregation == 'mean':
        deg = jnp.zeros((n_pad,), jnp.float32).at[dst].add(1.0)
        deg = jnp.where(deg == 0.0, 1.0, deg)
        A = A / deg[:, None]             # fold 1/deg into A once

    # One-time padding / packing (not per layer).  W is the fused
    # [W_self; W_neighbor] stack so the kernel does one transform matmul/layer.
    x_p = jnp.zeros((n_pad, c_pad), jnp.float32).at[:N, :in_c].set(
        x.astype(jnp.float32))
    w = jnp.zeros((L, 2 * c_pad, c_pad), jnp.float32)
    b = jnp.zeros((L, 1, c_pad), jnp.float32)
    for i, p in enumerate(params):
        ci, co = p['w_self'].shape
        w = w.at[i, :ci, :co].set(p['w_self'])
        w = w.at[i, c_pad:c_pad + ci, :co].set(p['w_neighbor'])
        b = b.at[i, 0, :co].set(p['bias'])

    kernel = functools.partial(sagraph_fused_kernel, num_layers=L)
    vmem = pl.BlockSpec(memory_space=pltpu.MemorySpace.VMEM)

    flops = L * (2 * n_pad * n_pad * c_pad          # A @ x
                 + 2 * n_pad * (2 * c_pad) * c_pad)  # fused transform
    bytes_accessed = (4 * n_pad * c_pad * 2          # x in, out
                      + 2 * n_pad * n_pad            # A (bf16)
                      + 2 * L * 2 * c_pad * c_pad    # fused weights (bf16)
                      + 4 * L * c_pad)               # biases

    out_p = pl.pallas_call(
        kernel,
        out_shape=jax.ShapeDtypeStruct((n_pad, c_pad), jnp.float32),
        in_specs=[vmem] * 4,
        out_specs=vmem,
        cost_estimate=pl.CostEstimate(flops=flops, transcendentals=0,
                                      bytes_accessed=bytes_accessed),
    )(x_p,
      A.astype(jnp.bfloat16),
      w.astype(jnp.bfloat16),
      b)
    # TODO(synk): for large graphs (N^2 or weights > VMEM) add a row-tiled grid
    # per layer instead of whole-array blocks.
    return out_p[:N, :out_c]


# ------------------------ parameter setup (plain JAX) ------------------------

def xavier_uniform(key, fan_in, fan_out):
    limit = (6.0 / (fan_in + fan_out)) ** 0.5
    return jax.random.uniform(key, (fan_in, fan_out), jnp.float32, -limit, limit)


def init_sagraph_v3(key, in_channels, hidden_channels, num_layers, out_channels):
    dims = [in_channels] + [hidden_channels] * (num_layers - 1) + [out_channels]
    params = []
    for i in range(num_layers):
        key, k1, k2 = jax.random.split(key, 3)
        params.append(dict(
            w_self=xavier_uniform(k1, dims[i], dims[i + 1]),
            w_neighbor=xavier_uniform(k2, dims[i], dims[i + 1]),
            bias=jnp.zeros((dims[i + 1],), jnp.float32),
        ))
    return params


# ------------------------------ pure-JAX reference ------------------------------

def _bf16_round(v):
    return v.astype(jnp.bfloat16).astype(jnp.float32)


def ref_forward(params, x, edge_index, aggregation='sum'):
    """Reference with the same bf16 operand rounding the kernel uses."""
    src, dst = edge_index[0], edge_index[1]
    N = x.shape[0]
    x = x.astype(jnp.float32)
    for i, p in enumerate(params):
        xb = _bf16_round(x)
        ws = _bf16_round(p['w_self'])
        wn = _bf16_round(p['w_neighbor'])
        out_self = xb @ ws
        diff = xb[src] - xb[dst]
        agg = jax.ops.segment_sum(diff, dst, num_segments=N)
        if aggregation == 'mean':
            deg = jax.ops.segment_sum(jnp.ones_like(dst, dtype=jnp.float32),
                                      dst, num_segments=N)
            deg = jnp.where(deg == 0.0, 1.0, deg)[:, None]
            agg = agg / deg
        out_neighbors = _bf16_round(agg) @ wn
        out = out_self + out_neighbors + p['bias']
        if i < len(params) - 1:
            out = jax.nn.relu(out)
        x = out
    return x


if __name__ == "__main__":
    key = jax.random.PRNGKey(0)
    N, E = 16, 32                      # nodes, edges
    in_c, hid_c, out_c, num_layers = 8, 32, 8, 3

    k_x, k_e, k_p = jax.random.split(key, 3)
    x = jax.random.normal(k_x, (N, in_c), jnp.float32)
    edge_index = jax.random.randint(k_e, (2, E), 0, N, jnp.int32)

    params = init_sagraph_v3(k_p, in_c, hid_c, num_layers, out_c)

    out = sagraph_v3_forward(params, x, edge_index, aggregation='sum')
    out = jax.block_until_ready(out)

    ref = jax.block_until_ready(ref_forward(params, x, edge_index))
    assert out.shape == (N, out_c)
    err = float(jnp.max(jnp.abs(out - ref)))
    assert jnp.allclose(out, ref, atol=2e-2, rtol=2e-2), f"mismatch vs reference, max abs err={err}"

    print("KERNEL_OK")
</pallas_src>

<mosaic_0001>
module attributes {stable_mosaic.version = 11 : i64} {
  func.func @sagraph_fused_kernel(%arg0: memref<16x128xf32, #tpu.memory_space<vmem>>, %arg1: memref<16x16xbf16, #tpu.memory_space<vmem>>, %arg2: memref<3x256x128xbf16, #tpu.memory_space<vmem>>, %arg3: memref<3x1x128xf32, #tpu.memory_space<vmem>>, %arg4: memref<16x128xf32, #tpu.memory_space<vmem>>) attributes {dimension_semantics = [], scalar_prefetch = 0 : i64, scratch_operands = 0 : i64, tpu.core_type = #tpu.core_type<tc>} {
    %c0 = arith.constant 0 : index
    %c0_0 = arith.constant 0 : index
    %0 = vector.load %arg0[%c0, %c0_0] : memref<16x128xf32, #tpu.memory_space<vmem>>, vector<16x128xf32>
    %c0_1 = arith.constant 0 : index
    %c0_2 = arith.constant 0 : index
    %1 = vector.load %arg1[%c0_1, %c0_2] : memref<16x16xbf16, #tpu.memory_space<vmem>>, vector<16x16xbf16>
    %2 = arith.truncf %0 : vector<16x128xf32> to vector<16x128xbf16>
    %cst = arith.constant dense<0.000000e+00> : vector<16x128xf32>
    %3 = tpu.matmul %1, %2, %cst {dimension_numbers = #tpu.dot_dimension_numbers<[1], [0], [0], [1], [0, 0, 1, 1], [], []>} : vector<16x16xbf16>, vector<16x128xbf16>, vector<16x128xf32> -> vector<16x128xf32>
    %4 = arith.truncf %3 : vector<16x128xf32> to vector<16x128xbf16>
    %5 = tpu.concatenate %2, %4 in 1 : vector<16x128xbf16>, vector<16x128xbf16> -> vector<16x256xbf16>
    %c0_3 = arith.constant 0 : index
    %c0_4 = arith.constant 0 : index
    %c0_5 = arith.constant 0 : index
    %6 = vector.load %arg2[%c0_3, %c0_4, %c0_5] : memref<3x256x128xbf16, #tpu.memory_space<vmem>>, vector<1x256x128xbf16>
    %7 = vector.shape_cast %6 : vector<1x256x128xbf16> to vector<256x128xbf16>
    %cst_6 = arith.constant dense<0.000000e+00> : vector<16x128xf32>
    %8 = tpu.matmul %5, %7, %cst_6 {dimension_numbers = #tpu.dot_dimension_numbers<[1], [0], [0], [1], [0, 0, 1, 1], [], []>} : vector<16x256xbf16>, vector<256x128xbf16>, vector<16x128xf32> -> vector<16x128xf32>
    %c0_7 = arith.constant 0 : index
    %c0_8 = arith.constant 0 : index
    %c0_9 = arith.constant 0 : index
    %9 = vector.load %arg3[%c0_7, %c0_8, %c0_9] : memref<3x1x128xf32, #tpu.memory_space<vmem>>, vector<1x1x128xf32>
    %10 = vector.shape_cast %9 : vector<1x1x128xf32> to vector<1x128xf32>
    %11 = vector.broadcast %10 : vector<1x128xf32> to vector<16x128xf32>
    %12 = arith.addf %8, %11 : vector<16x128xf32>
    %cst_10 = arith.constant 0.000000e+00 : f32
    %13 = vector.broadcast %cst_10 : f32 to vector<16x128xf32>
    %14 = arith.maximumf %12, %13 : vector<16x128xf32>
    %15 = arith.truncf %14 : vector<16x128xf32> to vector<16x128xbf16>
    %cst_11 = arith.constant dense<0.000000e+00> : vector<16x128xf32>
    %16 = tpu.matmul %1, %15, %cst_11 {dimension_numbers = #tpu.dot_dimension_numbers<[1], [0], [0], [1], [0, 0, 1, 1], [], []>} : vector<16x16xbf16>, vector<16x128xbf16>, vector<16x128xf32> -> vector<16x128xf32>
    %17 = arith.truncf %16 : vector<16x128xf32> to vector<16x128xbf16>
    %18 = tpu.concatenate %15, %17 in 1 : vector<16x128xbf16>, vector<16x128xbf16> -> vector<16x256xbf16>
    %c1 = arith.constant 1 : index
    %c0_12 = arith.constant 0 : index
    %c0_13 = arith.constant 0 : index
    %19 = vector.load %arg2[%c1, %c0_12, %c0_13] : memref<3x256x128xbf16, #tpu.memory_space<vmem>>, vector<1x256x128xbf16>
    %20 = vector.shape_cast %19 : vector<1x256x128xbf16> to vector<256x128xbf16>
    %cst_14 = arith.constant dense<0.000000e+00> : vector<16x128xf32>
    %21 = tpu.matmul %18, %20, %cst_14 {dimension_numbers = #tpu.dot_dimension_numbers<[1], [0], [0], [1], [0, 0, 1, 1], [], []>} : vector<16x256xbf16>, vector<256x128xbf16>, vector<16x128xf32> -> vector<16x128xf32>
    %c1_15 = arith.constant 1 : index
    %c0_16 = arith.constant 0 : index
    %c0_17 = arith.constant 0 : index
    %22 = vector.load %arg3[%c1_15, %c0_16, %c0_17] : memref<3x1x128xf32, #tpu.memory_space<vmem>>, vector<1x1x128xf32>
    %23 = vector.shape_cast %22 : vector<1x1x128xf32> to vector<1x128xf32>
    %24 = vector.broadcast %23 : vector<1x128xf32> to vector<16x128xf32>
    %25 = arith.addf %21, %24 : vector<16x128xf32>
    %cst_18 = arith.constant 0.000000e+00 : f32
    %26 = vector.broadcast %cst_18 : f32 to vector<16x128xf32>
    %27 = arith.maximumf %25, %26 : vector<16x128xf32>
    %28 = arith.truncf %27 : vector<16x128xf32> to vector<16x128xbf16>
    %cst_19 = arith.constant dense<0.000000e+00> : vector<16x128xf32>
    %29 = tpu.matmul %1, %28, %cst_19 {dimension_numbers = #tpu.dot_dimension_numbers<[1], [0], [0], [1], [0, 0, 1, 1], [], []>} : vector<16x16xbf16>, vector<16x128xbf16>, vector<16x128xf32> -> vector<16x128xf32>
    %30 = arith.truncf %29 : vector<16x128xf32> to vector<16x128xbf16>
    %31 = tpu.concatenate %28, %30 in 1 : vector<16x128xbf16>, vector<16x128xbf16> -> vector<16x256xbf16>
    %c2 = arith.constant 2 : index
    %c0_20 = arith.constant 0 : index
    %c0_21 = arith.constant 0 : index
    %32 = vector.load %arg2[%c2, %c0_20, %c0_21] : memref<3x256x128xbf16, #tpu.memory_space<vmem>>, vector<1x256x128xbf16>
    %33 = vector.shape_cast %32 : vector<1x256x128xbf16> to vector<256x128xbf16>
    %cst_22 = arith.constant dense<0.000000e+00> : vector<16x128xf32>
    %34 = tpu.matmul %31, %33, %cst_22 {dimension_numbers = #tpu.dot_dimension_numbers<[1], [0], [0], [1], [0, 0, 1, 1], [], []>} : vector<16x256xbf16>, vector<256x128xbf16>, vector<16x128xf32> -> vector<16x128xf32>
    %c2_23 = arith.constant 2 : index
    %c0_24 = arith.constant 0 : index
    %c0_25 = arith.constant 0 : index
    %35 = vector.load %arg3[%c2_23, %c0_24, %c0_25] : memref<3x1x128xf32, #tpu.memory_space<vmem>>, vector<1x1x128xf32>
    %36 = vector.shape_cast %35 : vector<1x1x128xf32> to vector<1x128xf32>
    %37 = vector.broadcast %36 : vector<1x128xf32> to vector<16x128xf32>
    %38 = arith.addf %34, %37 : vector<16x128xf32>
    %c0_26 = arith.constant 0 : index
    %c0_27 = arith.constant 0 : index
    %39 = vector.load %arg4[%c0_26, %c0_27] : memref<16x128xf32, #tpu.memory_space<vmem>>, vector<16x128xf32>
    tpu.vector_store %arg4[%c0_26, %c0_27], %38 {strides = array<i32>} : memref<16x128xf32, #tpu.memory_space<vmem>>, vector<16x128xf32>,
    return
  }
}

</mosaic_0001>

<llo_original>
// kernel: tpu_custom_call.1
$region0: #{tpu_custom_call.1}
  #allocation0 [shape = 'u32[]', space=smem, size = 0x4, offset = 0x4, fixed_abs, tag = 'smem constant byte address 0x4 - core index']
  #allocation1 [shape = 'u32[144,128]{1,0:T(1,128)}', space=vmem, size = 0x12000, scoped, tag = 'internal scratch']
  %s0 = inlined_call_operand.hbm [shape: f32[16,128], index: 0, kind: input, shape index: {}]
  %s1 = inlined_call_operand.hbm [shape: bf16[16,16], index: 1, kind: input, shape index: {}]
  %s2 = inlined_call_operand.hbm [shape: bf16[3,256,128], index: 2, kind: input, shape index: {}]
  %s3 = inlined_call_operand.vmem [shape: f32[3,1,128], index: 3, kind: input, shape index: {}]
  %s4 = inlined_call_operand.hbm [shape: f32[16,128], index: 4, kind: output, shape index: {}]
  %s5 = sld [smem:[#allocation0]]
  $region38: #{tpu_custom_call.1} parent=0
    _
  %s7 = ssub.s32 1, %s5
  %s8 = scalar_select 0, %s7, %s5
  $region1: #{tpu_custom_call.1} parent=0
    #allocation2 [shape = 'u8[8192]{0}', space=vmem, size = 0x2000, scoped, tag = 'input window, operand 0, single buffered']
    #allocation3 [shape = 's32[1]{0}', space=sflag, size = 0x4, scoped, tag = 'scoped memory for tpu_custom_call.1']
    #allocation4 [shape = 's32[1]{0}', space=sflag, size = 0x4, scoped, tag = 'scoped memory for tpu_custom_call.1']
    #allocation5 [shape = 'u8[4096]{0}', space=vmem, size = 0x1000, scoped, tag = 'input window, operand 1, single buffered']
    #allocation6 [shape = 's32[1]{0}', space=sflag, size = 0x4, scoped, tag = 'scoped memory for tpu_custom_call.1']
    #allocation7 [shape = 'u8[196608]{0}', space=vmem, size = 0x30000, scoped, tag = 'input window, operand 2, single buffered']
    #allocation8 [shape = 'u8[8192]{0}', space=vmem, size = 0x2000, scoped, tag = 'output window, operand 0, single buffered']
    %9 = vsyncpa [#allocation3], 0
    %10 = vsyncpa [#allocation6], 0
    %11 = vsyncpa [#allocation4], 0
    // Predicated region
    $region2: #{tpu_custom_call.1} parent=1 // pred_check
      _
    $region3: #{tpu_custom_call.1} parent=1 // pred_check_branch
      %13 = sbr.rel (0) target = $region5
    $region4: #{tpu_custom_call.1} parent=1 // pred_region
      %s15 = ssub.s32 256, 256
      %16 = vsyncadd [#allocation3], %s15
      %s17 = sshll.u32 [#allocation2], 4
      %s18 = int_to_ptr.vmem [resolvable:$true] %s17
      %23 = dma.hbm_to_vmem [thread:$0]  %s0, 256, %s18, [#allocation3], 128, 128, 8
    $region5: #{tpu_custom_call.1} parent=1 // pred_fallthru
      _
    // Predicated region
    $region6: #{tpu_custom_call.1} parent=1 // pred_check
      _
    $region7: #{tpu_custom_call.1} parent=1 // pred_check_branch
      %25 = sbr.rel (0) target = $region9
    $region8: #{tpu_custom_call.1} parent=1 // pred_region
      %s27 = ssub.s32 128, 128
      %28 = vsyncadd [#allocation6], %s27
      %s29 = sshll.u32 [#allocation5], 4
      %s30 = int_to_ptr.vmem [resolvable:$true] %s29
      %35 = dma.hbm_to_vmem [thread:$0]  %s1, 128, %s30, [#allocation6], 64, 64, 4
    $region9: #{tpu_custom_call.1} parent=1 // pred_fallthru
      _
    // Predicated region
    $region10: #{tpu_custom_call.1} parent=1 // pred_check
      _
    $region11: #{tpu_custom_call.1} parent=1 // pred_check_branch
      %37 = sbr.rel (0) target = $region13
    $region12: #{tpu_custom_call.1} parent=1 // pred_region
      %s39 = ssub.s32 6144, 6144
      %40 = vsyncadd [#allocation6], %s39
      %s41 = sshll.u32 [#allocation7], 4
      %s42 = int_to_ptr.vmem [resolvable:$true] %s41
      %47 = dma.hbm_to_vmem [thread:$0]  %s2, 6144, %s42, [#allocation6], 64, 64, 4
    $region13: #{tpu_custom_call.1} parent=1 // pred_fallthru
      _
    // Predicated region
    $region14: #{tpu_custom_call.1} parent=1 // pred_check
      _
    $region15: #{tpu_custom_call.1} parent=1 // pred_check_branch
      %49 = sbr.rel (0) target = $region17
    $region16: #{tpu_custom_call.1} parent=1 // pred_region
      _
    $region17: #{tpu_custom_call.1} parent=1 // pred_fallthru
      _
    // Predicated region
    $region18: #{tpu_custom_call.1} parent=1 // pred_check
      _
    $region19: #{tpu_custom_call.1} parent=1 // pred_check_branch
      %51 = sbr.rel (0) target = $region21
    $region20: #{tpu_custom_call.1} parent=1 // pred_region
      %52 = dma.done [#allocation3], 256
    $region21: #{tpu_custom_call.1} parent=1 // pred_fallthru
      _
    // Predicated region
    $region22: #{tpu_custom_call.1} parent=1 // pred_check
      _
    $region23: #{tpu_custom_call.1} parent=1 // pred_check_branch
      %54 = sbr.rel (0) target = $region25
    $region24: #{tpu_custom_call.1} parent=1 // pred_region
      %55 = dma.done [#allocation6], 128
    $region25: #{tpu_custom_call.1} parent=1 // pred_fallthru
      _
    // Predicated region
    $region26: #{tpu_custom_call.1} parent=1 // pred_check
      _
    $region27: #{tpu_custom_call.1} parent=1 // pred_check_branch
      %57 = sbr.rel (0) target = $region29
    $region28: #{tpu_custom_call.1} parent=1 // pred_region
      %58 = dma.done [#allocation6], 6144
    $region29: #{tpu_custom_call.1} parent=1 // pred_fallthru
      _
    %v60 = vld [vmem:[#allocation2] sm:$0xff]
    %v61 = vld [vmem:[#allocation2 + $0x8] sm:$0xff]
    %v62 = vld [vmem:[#allocation5] sm:$0xf]
    %v63 = vld [vmem:[#allocation5 + $0x4] sm:$0xf]
    %v64 = vpack.c.bf16 %v61, %v60
    %v67 = vunpack.c.l.b16 %v62
    %v68 = vunpack.c.l.b16 %v63
    %v69 = vpack.c.b16 %v68, %v67
    %vm70 = vcmask 130048
    %v72 = vsel %vm70, %v69, 0
    %74 = vmatprep.subr.bf16.mxu0 0
    %75 = vmatpush1.bf16.msra.mxu0 0
    %76 = vmatprep.subr.bf16.mxu0 0
    %77 = vmatpush1.bf16.msra.mxu0 0
    %78 = vmatprep.subr.bf16.mxu0 0
    %79 = vmatpush1.bf16.msra.mxu0 0
    %80 = vmatprep.subr.bf16.mxu0 0
    %81 = vmatpush1.bf16.msra.mxu0 0
    %82 = vmatprep.subr.bf16.mxu0 0
    %83 = vmatpush1.bf16.msra.mxu0 0
    %84 = vmatprep.subr.bf16.mxu0 0
    %85 = vmatpush1.bf16.msra.mxu0 0
    %86 = vmatprep.subr.bf16.mxu0 0
    %87 = vmatpush1.bf16.msra.mxu0 0
    %88 = vmatprep.subr.bf16.mxu0 0
    %89 = vmatpush1.bf16.msra.mxu0 %v64
    %90 = vmatprep.subr.bf16.mxu0 0
    %91 = vmatpush2.bf16.msra.mxu0 0
    %92 = vmatprep.subr.bf16.mxu0 0
    %93 = vmatpush2.bf16.msra.mxu0 0
    %94 = vmatprep.subr.bf16.mxu0 0
    %95 = vmatpush2.bf16.msra.mxu0 0
    %96 = vmatprep.subr.bf16.mxu0 0
    %97 = vmatpush2.bf16.msra.mxu0 0
    %98 = vmatprep.subr.bf16.mxu0 0
    %99 = vmatpush2.bf16.msra.mxu0 0
    %100 = vmatprep.subr.bf16.mxu0 0
    %101 = vmatpush2.bf16.msra.mxu0 0
    %102 = vmatprep.subr.bf16.mxu0 0
    %103 = vmatpush2.bf16.msra.mxu0 0
    %104 = vmatprep.subr.bf16.mxu0 0
    %105 = vmatpush2.bf16.msra.mxu0 0
    %106 = vmatprep.mubr.bf16.mxu0 0
    %107 = vmatmul.mubr.bf16.gmra.mxu0 %v72
    %v108 = vpop.f32.mrf.mxu0
    %v109 = vadd.f32 0.0, %v108
    %v110 = vpop.f32.mrf.mxu0
    %v111 = vpop.f32.mrf.mxu0
    %v112 = vadd.f32 0.0, %v111
    %v113 = vpop.f32.mrf.mxu0
    %114 = vdwg.mxu0
    %v115 = vpack.c.bf16 %v112, %v109
    %v116 = vld [vmem:[#allocation7] sm:$0xf]
    %v117 = vld [vmem:[#allocation7 + $0x4] sm:$0xf]
    %v118 = vld [vmem:[#allocation7 + $0x8] sm:$0xf]
    %v119 = vld [vmem:[#allocation7 + $0xc] sm:$0xf]
    %v120 = vld [vmem:[#allocation7 + $0x10] sm:$0xf]
    %v121 = vld [vmem:[#allocation7 + $0x14] sm:$0xf]
    %v122 = vld [vmem:[#allocation7 + $0x18] sm:$0xf]
    %v123 = vld [vmem:[#allocation7 + $0x1c] sm:$0xf]
    %v124 = vld [vmem:[#allocation7 + $0x20] sm:$0xf]
    %v125 = vld [vmem:[#allocation7 + $0x24] sm:$0xf]
    %v126 = vld [vmem:[#allocation7 + $0x28] sm:$0xf]
    %v127 = vld [vmem:[#allocation7 + $0x2c] sm:$0xf]
    %v128 = vld [vmem:[#allocation7 + $0x30] sm:$0xf]
    %v129 = vld [vmem:[#allocation7 + $0x34] sm:$0xf]
    %v130 = vld [vmem:[#allocation7 + $0x38] sm:$0xf]
    %v131 = vld [vmem:[#allocation7 + $0x3c] sm:$0xf]
    %v132 = vld [vmem:[#allocation7 + $0x40] sm:$0xf]
    %v133 = vld [vmem:[#allocation7 + $0x44] sm:$0xf]
    %v134 = vld [vmem:[#allocation7 + $0x48] sm:$0xf]
    %v135 = vld [vmem:[#allocation7 + $0x4c] sm:$0xf]
    %v136 = vld [vmem:[#allocation7 + $0x50] sm:$0xf]
    %v137 = vld [vmem:[#allocation7 + $0x54] sm:$0xf]
    %v138 = vld [vmem:[#allocation7 + $0x58] sm:$0xf]
    %v139 = vld [vmem:[#allocation7 + $0x5c] sm:$0xf]
    %v140 = vld [vmem:[#allocation7 + $0x60] sm:$0xf]
    %v141 = vld [vmem:[#allocation7 + $0x64] sm:$0xf]
    %v142 = vld [vmem:[#allocation7 + $0x68] sm:$0xf]
    %v143 = vld [vmem:[#allocation7 + $0x6c] sm:$0xf]
    %v144 = vld [vmem:[#allocation7 + $0x70] sm:$0xf]
    %v145 = vld [vmem:[#allocation7 + $0x74] sm:$0xf]
    %v146 = vld [vmem:[#allocation7 + $0x78] sm:$0xf]
    %v147 = vld [vmem:[#allocation7 + $0x7c] sm:$0xf]
    %v148 = vld [vmem:[%s3] sm:$0x1]
    %v150 = vlaneseq
    %v151 = vshrl.u32 %v150, 7
    %v152 = vsub.s32 0, %v151
    %v153 = vrot.slane %v148, %v152
    %v187 = vunpack.c.l.b16 %v116
    %v188 = vunpack.c.l.b16 %v117
    %v189 = vunpack.c.l.b16 %v118
    %v190 = vunpack.c.l.b16 %v119
    %v191 = vunpack.c.l.b16 %v120
    %v192 = vunpack.c.l.b16 %v121
    %v193 = vunpack.c.l.b16 %v122
    %v194 = vunpack.c.l.b16 %v123
    %v195 = vunpack.c.l.b16 %v124
    %v196 = vunpack.c.l.b16 %v125
    %v197 = vunpack.c.l.b16 %v126
    %v198 = vunpack.c.l.b16 %v127
    %v199 = vunpack.c.l.b16 %v128
    %v200 = vunpack.c.l.b16 %v129
    %v201 = vunpack.c.l.b16 %v130
    %v202 = vunpack.c.l.b16 %v131
    %v203 = vunpack.c.l.b16 %v132
    %v204 = vunpack.c.l.b16 %v133
    %v205 = vunpack.c.l.b16 %v134
    %v206 = vunpack.c.l.b16 %v135
    %v207 = vunpack.c.l.b16 %v136
    %v208 = vunpack.c.l.b16 %v137
    %v209 = vunpack.c.l.b16 %v138
    %v210 = vunpack.c.l.b16 %v139
    %v211 = vunpack.c.l.b16 %v140
    %v212 = vunpack.c.l.b16 %v141
    %v213 = vunpack.c.l.b16 %v142
    %v214 = vunpack.c.l.b16 %v143
    %v215 = vunpack.c.l.b16 %v144
    %v216 = vunpack.c.l.b16 %v145
    %v217 = vunpack.c.l.b16 %v146
    %v218 = vunpack.c.l.b16 %v147
    %v219 = vpack.c.b16 %v188, %v187
    %v220 = vpack.c.b16 %v190, %v189
    %v221 = vpack.c.b16 %v192, %v191
    %v222 = vpack.c.b16 %v194, %v193
    %v223 = vpack.c.b16 %v196, %v195
    %v224 = vpack.c.b16 %v198, %v197
    %v225 = vpack.c.b16 %v200, %v199
    %v226 = vpack.c.b16 %v202, %v201
    %v227 = vpack.c.b16 %v204, %v203
    %v228 = vpack.c.b16 %v206, %v205
    %v229 = vpack.c.b16 %v208, %v207
    %v230 = vpack.c.b16 %v210, %v209
    %v231 = vpack.c.b16 %v212, %v211
    %v232 = vpack.c.b16 %v214, %v213
    %v233 = vpack.c.b16 %v216, %v215
    %v234 = vpack.c.b16 %v218, %v217
    %251 = vmatprep.subr.bf16.mxu0 0
    %252 = vmatpush1.bf16.msra.mxu0 %v226
    %253 = vmatprep.subr.bf16.mxu0 0
    %254 = vmatpush1.bf16.msra.mxu0 %v225
    %255 = vmatprep.subr.bf16.mxu0 0
    %256 = vmatpush1.bf16.msra.mxu0 %v224
    %257 = vmatprep.subr.bf16.mxu0 0
    %258 = vmatpush1.bf16.msra.mxu0 %v223
    %259 = vmatprep.subr.bf16.mxu0 0
    %260 = vmatpush1.bf16.msra.mxu0 %v222
    %261 = vmatprep.subr.bf16.mxu0 0
    %262 = vmatpush1.bf16.msra.mxu0 %v221
    %263 = vmatprep.subr.bf16.mxu0 0
    %264 = vmatpush1.bf16.msra.mxu0 %v220
    %265 = vmatprep.subr.bf16.mxu0 0
    %266 = vmatpush1.bf16.msra.mxu0 %v219
    %267 = vmatprep.subr.bf16.mxu0 0
    %268 = vmatpush2.bf16.msra.mxu0 %v234
    %269 = vmatprep.subr.bf16.mxu0 0
    %270 = vmatpush2.bf16.msra.mxu0 %v233
    %271 = vmatprep.subr.bf16.mxu0 0
    %272 = vmatpush2.bf16.msra.mxu0 %v232
    %273 = vmatprep.subr.bf16.mxu0 0
    %274 = vmatpush2.bf16.msra.mxu0 %v231
    %275 = vmatprep.subr.bf16.mxu0 0
    %276 = vmatpush2.bf16.msra.mxu0 %v230
    %277 = vmatprep.subr.bf16.mxu0 0
    %278 = vmatpush2.bf16.msra.mxu0 %v229
    %279 = vmatprep.subr.bf16.mxu0 0
    %280 = vmatpush2.bf16.msra.mxu0 %v228
    %281 = vmatprep.subr.bf16.mxu0 0
    %282 = vmatpush2.bf16.msra.mxu0 %v227
    %283 = vmatprep.mubr.bf16.mxu0 %v115
    %284 = vmatmul.mubr.bf16.gmra.mxu0 %v64
    %v285 = vpop.f32.mrf.mxu0
    %v286 = vadd.f32 %v153, %v285
    %v287 = vpop.f32.mrf.mxu0
    %v288 = vpop.f32.mrf.mxu0
    %v289 = vadd.f32 %v153, %v288
    %v290 = vpop.f32.mrf.mxu0
    %291 = vdwg.mxu0
    %v292 = vmax.f32 %v286, 0.0
    %v293 = vmax.f32 %v289, 0.0
    %v294 = vpack.c.bf16 %v293, %v292
    %295 = vmatprep.subr.bf16.mxu0 0
    %296 = vmatpush1.bf16.msra.mxu0 0
    %297 = vmatprep.subr.bf16.mxu0 0
    %298 = vmatpush1.bf16.msra.mxu0 0
    %299 = vmatprep.subr.bf16.mxu0 0
    %300 = vmatpush1.bf16.msra.mxu0 0
    %301 = vmatprep.subr.bf16.mxu0 0
    %302 = vmatpush1.bf16.msra.mxu0 0
    %303 = vmatprep.subr.bf16.mxu0 0
    %304 = vmatpush1.bf16.msra.mxu0 0
    %305 = vmatprep.subr.bf16.mxu0 0
    %306 = vmatpush1.bf16.msra.mxu0 0
    %307 = vmatprep.subr.bf16.mxu0 0
    %308 = vmatpush1.bf16.msra.mxu0 0
    %309 = vmatprep.subr.bf16.mxu0 0
    %310 = vmatpush1.bf16.msra.mxu0 %v294
    %311 = vmatprep.subr.bf16.mxu0 0
    %312 = vmatpush2.bf16.msra.mxu0 0
    %313 = vmatprep.subr.bf16.mxu0 0
    %314 = vmatpush2.bf16.msra.mxu0 0
    %315 = vmatprep.subr.bf16.mxu0 0
    %316 = vmatpush2.bf16.msra.mxu0 0
    %317 = vmatprep.subr.bf16.mxu0 0
    %318 = vmatpush2.bf16.msra.mxu0 0
    %319 = vmatprep.subr.bf16.mxu0 0
    %320 = vmatpush2.bf16.msra.mxu0 0
    %321 = vmatprep.subr.bf16.mxu0 0
    %322 = vmatpush2.bf16.msra.mxu0 0
    %323 = vmatprep.subr.bf16.mxu0 0
    %324 = vmatpush2.bf16.msra.mxu0 0
    %325 = vmatprep.subr.bf16.mxu0 0
    %326 = vmatpush2.bf16.msra.mxu0 0
    %327 = vmatprep.mubr.bf16.mxu0 0
    %328 = vmatmul.mubr.bf16.gmra.mxu0 %v72
    %v329 = vpop.f32.mrf.mxu0
    %v330 = vadd.f32 0.0, %v329
    %v331 = vpop.f32.mrf.mxu0
    %v332 = vpop.f32.mrf.mxu0
    %v333 = vadd.f32 0.0, %v332
    %v334 = vpop.f32.mrf.mxu0
    %335 = vdwg.mxu0
    %v336 = vpack.c.bf16 %v333, %v330
    %s337 = scalar_lea.vmem [#allocation7], 128
    %v338 = vld [vmem:[%s337] sm:$0xf]
    %v339 = vld [vmem:[%s337 + $0x4] sm:$0xf]
    %v340 = vld [vmem:[%s337 + $0x8] sm:$0xf]
    %v341 = vld [vmem:[%s337 + $0xc] sm:$0xf]
    %v342 = vld [vmem:[%s337 + $0x10] sm:$0xf]
    %v343 = vld [vmem:[%s337 + $0x14] sm:$0xf]
    %v344 = vld [vmem:[%s337 + $0x18] sm:$0xf]
    %v345 = vld [vmem:[%s337 + $0x1c] sm:$0xf]
    %v346 = vld [vmem:[%s337 + $0x20] sm:$0xf]
    %v347 = vld [vmem:[%s337 + $0x24] sm:$0xf]
    %v348 = vld [vmem:[%s337 + $0x28] sm:$0xf]
    %v349 = vld [vmem:[%s337 + $0x2c] sm:$0xf]
    %v350 = vld [vmem:[%s337 + $0x30] sm:$0xf]
    %v351 = vld [vmem:[%s337 + $0x34] sm:$0xf]
    %v352 = vld [vmem:[%s337 + $0x38] sm:$0xf]
    %v353 = vld [vmem:[%s337 + $0x3c] sm:$0xf]
    %v354 = vld [vmem:[%s337 + $0x40] sm:$0xf]
    %v355 = vld [vmem:[%s337 + $0x44] sm:$0xf]
    %v356 = vld [vmem:[%s337 + $0x48] sm:$0xf]
    %v357 = vld [vmem:[%s337 + $0x4c] sm:$0xf]
    %v358 = vld [vmem:[%s337 + $0x50] sm:$0xf]
    %v359 = vld [vmem:[%s337 + $0x54] sm:$0xf]
    %v360 = vld [vmem:[%s337 + $0x58] sm:$0xf]
    %v361 = vld [vmem:[%s337 + $0x5c] sm:$0xf]
    %v362 = vld [vmem:[%s337 + $0x60] sm:$0xf]
    %v363 = vld [vmem:[%s337 + $0x64] sm:$0xf]
    %v364 = vld [vmem:[%s337 + $0x68] sm:$0xf]
    %v365 = vld [vmem:[%s337 + $0x6c] sm:$0xf]
    %v366 = vld [vmem:[%s337 + $0x70] sm:$0xf]
    %v367 = vld [vmem:[%s337 + $0x74] sm:$0xf]
    %v368 = vld [vmem:[%s337 + $0x78] sm:$0xf]
    %v369 = vld [vmem:[%s337 + $0x7c] sm:$0xf]
    %s370 = scalar_lea.vmem %s3, 1
    %v371 = vld [vmem:[%s370] sm:$0x1]
    %v373 = vlaneseq
    %v374 = vshrl.u32 %v373, 7
    %v375 = vsub.s32 0, %v374
    %v376 = vrot.slane %v371, %v375
    %v410 = vunpack.c.l.b16 %v338
    %v411 = vunpack.c.l.b16 %v339
    %v412 = vunpack.c.l.b16 %v340
    %v413 = vunpack.c.l.b16 %v341
    %v414 = vunpack.c.l.b16 %v342
    %v415 = vunpack.c.l.b16 %v343
    %v416 = vunpack.c.l.b16 %v344
    %v417 = vunpack.c.l.b16 %v345
    %v418 = vunpack.c.l.b16 %v346
    %v419 = vunpack.c.l.b16 %v347
    %v420 = vunpack.c.l.b16 %v348
    %v421 = vunpack.c.l.b16 %v349
    %v422 = vunpack.c.l.b16 %v350
    %v423 = vunpack.c.l.b16 %v351
    %v424 = vunpack.c.l.b16 %v352
    %v425 = vunpack.c.l.b16 %v353
    %v426 = vunpack.c.l.b16 %v354
    %v427 = vunpack.c.l.b16 %v355
    %v428 = vunpack.c.l.b16 %v356
    %v429 = vunpack.c.l.b16 %v357
    %v430 = vunpack.c.l.b16 %v358
    %v431 = vunpack.c.l.b16 %v359
    %v432 = vunpack.c.l.b16 %v360
    %v433 = vunpack.c.l.b16 %v361
    %v434 = vunpack.c.l.b16 %v362
    %v435 = vunpack.c.l.b16 %v363
    %v436 = vunpack.c.l.b16 %v364
    %v437 = vunpack.c.l.b16 %v365
    %v438 = vunpack.c.l.b16 %v366
    %v439 = vunpack.c.l.b16 %v367
    %v440 = vunpack.c.l.b16 %v368
    %v441 = vunpack.c.l.b16 %v369
    %v442 = vpack.c.b16 %v411, %v410
    %v443 = vpack.c.b16 %v413, %v412
    %v444 = vpack.c.b16 %v415, %v414
    %v445 = vpack.c.b16 %v417, %v416
    %v446 = vpack.c.b16 %v419, %v418
    %v447 = vpack.c.b16 %v421, %v420
    %v448 = vpack.c.b16 %v423, %v422
    %v449 = vpack.c.b16 %v425, %v424
    %v450 = vpack.c.b16 %v427, %v426
    %v451 = vpack.c.b16 %v429, %v428
    %v452 = vpack.c.b16 %v431, %v430
    %v453 = vpack.c.b16 %v433, %v432
    %v454 = vpack.c.b16 %v435, %v434
    %v455 = vpack.c.b16 %v437, %v436
    %v456 = vpack.c.b16 %v439, %v438
    %v457 = vpack.c.b16 %v441, %v440
    %474 = vmatprep.subr.bf16.mxu0 0
    %475 = vmatpush1.bf16.msra.mxu0 %v449
    %476 = vmatprep.subr.bf16.mxu0 0
    %477 = vmatpush1.bf16.msra.mxu0 %v448
    %478 = vmatprep.subr.bf16.mxu0 0
    %479 = vmatpush1.bf16.msra.mxu0 %v447
    %480 = vmatprep.subr.bf16.mxu0 0
    %481 = vmatpush1.bf16.msra.mxu0 %v446
    %482 = vmatprep.subr.bf16.mxu0 0
    %483 = vmatpush1.bf16.msra.mxu0 %v445
    %484 = vmatprep.subr.bf16.mxu0 0
    %485 = vmatpush1.bf16.msra.mxu0 %v444
    %486 = vmatprep.subr.bf16.mxu0 0
    %487 = vmatpush1.bf16.msra.mxu0 %v443
    %488 = vmatprep.subr.bf16.mxu0 0
    %489 = vmatpush1.bf16.msra.mxu0 %v442
    %490 = vmatprep.subr.bf16.mxu0 0
    %491 = vmatpush2.bf16.msra.mxu0 %v457
    %492 = vmatprep.subr.bf16.mxu0 0
    %493 = vmatpush2.bf16.msra.mxu0 %v456
    %494 = vmatprep.subr.bf16.mxu0 0
    %495 = vmatpush2.bf16.msra.mxu0 %v455
    %496 = vmatprep.subr.bf16.mxu0 0
    %497 = vmatpush2.bf16.msra.mxu0 %v454
    %498 = vmatprep.subr.bf16.mxu0 0
    %499 = vmatpush2.bf16.msra.mxu0 %v453
    %500 = vmatprep.subr.bf16.mxu0 0
    %501 = vmatpush2.bf16.msra.mxu0 %v452
    %502 = vmatprep.subr.bf16.mxu0 0
    %503 = vmatpush2.bf16.msra.mxu0 %v451
    %504 = vmatprep.subr.bf16.mxu0 0
    %505 = vmatpush2.bf16.msra.mxu0 %v450
    %506 = vmatprep.mubr.bf16.mxu0 %v336
    %507 = vmatmul.mubr.bf16.gmra.mxu0 %v294
    %v508 = vpop.f32.mrf.mxu0
    %v509 = vadd.f32 %v376, %v508
    %v510 = vpop.f32.mrf.mxu0
    %v511 = vpop.f32.mrf.mxu0
    %v512 = vadd.f32 %v376, %v511
    %v513 = vpop.f32.mrf.mxu0
    %514 = vdwg.mxu0
    %v515 = vmax.f32 %v509, 0.0
    %v516 = vmax.f32 %v512, 0.0
    %v517 = vpack.c.bf16 %v516, %v515
    %518 = vmatprep.subr.bf16.mxu0 0
    %519 = vmatpush1.bf16.msra.mxu0 0
    %520 = vmatprep.subr.bf16.mxu0 0
    %521 = vmatpush1.bf16.msra.mxu0 0
    %522 = vmatprep.subr.bf16.mxu0 0
    %523 = vmatpush1.bf16.msra.mxu0 0
    %524 = vmatprep.subr.bf16.mxu0 0
    %525 = vmatpush1.bf16.msra.mxu0 0
    %526 = vmatprep.subr.bf16.mxu0 0
    %527 = vmatpush1.bf16.msra.mxu0 0
    %528 = vmatprep.subr.bf16.mxu0 0
    %529 = vmatpush1.bf16.msra.mxu0 0
    %530 = vmatprep.subr.bf16.mxu0 0
    %531 = vmatpush1.bf16.msra.mxu0 0
    %532 = vmatprep.subr.bf16.mxu0 0
    %533 = vmatpush1.bf16.msra.mxu0 %v517
    %534 = vmatprep.subr.bf16.mxu0 0
    %535 = vmatpush2.bf16.msra.mxu0 0
    %536 = vmatprep.subr.bf16.mxu0 0
    %537 = vmatpush2.bf16.msra.mxu0 0
    %538 = vmatprep.subr.bf16.mxu0 0
    %539 = vmatpush2.bf16.msra.mxu0 0
    %540 = vmatprep.subr.bf16.mxu0 0
    %541 = vmatpush2.bf16.msra.mxu0 0
    %542 = vmatprep.subr.bf16.mxu0 0
    %543 = vmatpush2.bf16.msra.mxu0 0
    %544 = vmatprep.subr.bf16.mxu0 0
    %545 = vmatpush2.bf16.msra.mxu0 0
    %546 = vmatprep.subr.bf16.mxu0 0
    %547 = vmatpush2.bf16.msra.mxu0 0
    %548 = vmatprep.subr.bf16.mxu0 0
    %549 = vmatpush2.bf16.msra.mxu0 0
    %550 = vmatprep.mubr.bf16.mxu0 0
    %551 = vmatmul.mubr.bf16.gmra.mxu0 %v72
    %v552 = vpop.f32.mrf.mxu0
    %v553 = vadd.f32 0.0, %v552
    %v554 = vpop.f32.mrf.mxu0
    %v555 = vpop.f32.mrf.mxu0
    %v556 = vadd.f32 0.0, %v555
    %v557 = vpop.f32.mrf.mxu0
    %558 = vdwg.mxu0
    %v559 = vpack.c.bf16 %v556, %v553
    %s560 = scalar_lea.vmem [#allocation7], 256
    %v561 = vld [vmem:[%s560] sm:$0xf]
    %v562 = vld [vmem:[%s560 + $0x4] sm:$0xf]
    %v563 = vld [vmem:[%s560 + $0x8] sm:$0xf]
    %v564 = vld [vmem:[%s560 + $0xc] sm:$0xf]
    %v565 = vld [vmem:[%s560 + $0x10] sm:$0xf]
    %v566 = vld [vmem:[%s560 + $0x14] sm:$0xf]
    %v567 = vld [vmem:[%s560 + $0x18] sm:$0xf]
    %v568 = vld [vmem:[%s560 + $0x1c] sm:$0xf]
    %v569 = vld [vmem:[%s560 + $0x20] sm:$0xf]
    %v570 = vld [vmem:[%s560 + $0x24] sm:$0xf]
    %v571 = vld [vmem:[%s560 + $0x28] sm:$0xf]
    %v572 = vld [vmem:[%s560 + $0x2c] sm:$0xf]
    %v573 = vld [vmem:[%s560 + $0x30] sm:$0xf]
    %v574 = vld [vmem:[%s560 + $0x34] sm:$0xf]
    %v575 = vld [vmem:[%s560 + $0x38] sm:$0xf]
    %v576 = vld [vmem:[%s560 + $0x3c] sm:$0xf]
    %v577 = vld [vmem:[%s560 + $0x40] sm:$0xf]
    %v578 = vld [vmem:[%s560 + $0x44] sm:$0xf]
    %v579 = vld [vmem:[%s560 + $0x48] sm:$0xf]
    %v580 = vld [vmem:[%s560 + $0x4c] sm:$0xf]
    %v581 = vld [vmem:[%s560 + $0x50] sm:$0xf]
    %v582 = vld [vmem:[%s560 + $0x54] sm:$0xf]
    %v583 = vld [vmem:[%s560 + $0x58] sm:$0xf]
    %v584 = vld [vmem:[%s560 + $0x5c] sm:$0xf]
    %v585 = vld [vmem:[%s560 + $0x60] sm:$0xf]
    %v586 = vld [vmem:[%s560 + $0x64] sm:$0xf]
    %v587 = vld [vmem:[%s560 + $0x68] sm:$0xf]
    %v588 = vld [vmem:[%s560 + $0x6c] sm:$0xf]
    %v589 = vld [vmem:[%s560 + $0x70] sm:$0xf]
    %v590 = vld [vmem:[%s560 + $0x74] sm:$0xf]
    %v591 = vld [vmem:[%s560 + $0x78] sm:$0xf]
    %v592 = vld [vmem:[%s560 + $0x7c] sm:$0xf]
    %s593 = scalar_lea.vmem %s3, 2
    %v594 = vld [vmem:[%s593] sm:$0x1]
    %v596 = vlaneseq
    %v597 = vshrl.u32 %v596, 7
    %v598 = vsub.s32 0, %v597
    %v599 = vrot.slane %v594, %v598
    %v633 = vunpack.c.l.b16 %v561
    %v634 = vunpack.c.l.b16 %v562
    %v635 = vunpack.c.l.b16 %v563
    %v636 = vunpack.c.l.b16 %v564
    %v637 = vunpack.c.l.b16 %v565
    %v638 = vunpack.c.l.b16 %v566
    %v639 = vunpack.c.l.b16 %v567
    %v640 = vunpack.c.l.b16 %v568
    %v641 = vunpack.c.l.b16 %v569
    %v642 = vunpack.c.l.b16 %v570
    %v643 = vunpack.c.l.b16 %v571
    %v644 = vunpack.c.l.b16 %v572
    %v645 = vunpack.c.l.b16 %v573
    %v646 = vunpack.c.l.b16 %v574
    %v647 = vunpack.c.l.b16 %v575
    %v648 = vunpack.c.l.b16 %v576
    %v649 = vunpack.c.l.b16 %v577
    %v650 = vunpack.c.l.b16 %v578
    %v651 = vunpack.c.l.b16 %v579
    %v652 = vunpack.c.l.b16 %v580
    %v653 = vunpack.c.l.b16 %v581
    %v654 = vunpack.c.l.b16 %v582
    %v655 = vunpack.c.l.b16 %v583
    %v656 = vunpack.c.l.b16 %v584
    %v657 = vunpack.c.l.b16 %v585
    %v658 = vunpack.c.l.b16 %v586
    %v659 = vunpack.c.l.b16 %v587
    %v660 = vunpack.c.l.b16 %v588
    %v661 = vunpack.c.l.b16 %v589
    %v662 = vunpack.c.l.b16 %v590
    %v663 = vunpack.c.l.b16 %v591
    %v664 = vunpack.c.l.b16 %v592
    %v665 = vpack.c.b16 %v634, %v633
    %v666 = vpack.c.b16 %v636, %v635
    %v667 = vpack.c.b16 %v638, %v637
    %v668 = vpack.c.b16 %v640, %v639
    %v669 = vpack.c.b16 %v642, %v641
    %v670 = vpack.c.b16 %v644, %v643
    %v671 = vpack.c.b16 %v646, %v645
    %v672 = vpack.c.b16 %v648, %v647
    %v673 = vpack.c.b16 %v650, %v649
    %v674 = vpack.c.b16 %v652, %v651
    %v675 = vpack.c.b16 %v654, %v653
    %v676 = vpack.c.b16 %v656, %v655
    %v677 = vpack.c.b16 %v658, %v657
    %v678 = vpack.c.b16 %v660, %v659
    %v679 = vpack.c.b16 %v662, %v661
    %v680 = vpack.c.b16 %v664, %v663
    %697 = vmatprep.subr.bf16.mxu0 0
    %698 = vmatpush1.bf16.msra.mxu0 %v672
    %699 = vmatprep.subr.bf16.mxu0 0
    %700 = vmatpush1.bf16.msra.mxu0 %v671
    %701 = vmatprep.subr.bf16.mxu0 0
    %702 = vmatpush1.bf16.msra.mxu0 %v670
    %703 = vmatprep.subr.bf16.mxu0 0
    %704 = vmatpush1.bf16.msra.mxu0 %v669
    %705 = vmatprep.subr.bf16.mxu0 0
    %706 = vmatpush1.bf16.msra.mxu0 %v668
    %707 = vmatprep.subr.bf16.mxu0 0
    %708 = vmatpush1.bf16.msra.mxu0 %v667
    %709 = vmatprep.subr.bf16.mxu0 0
    %710 = vmatpush1.bf16.msra.mxu0 %v666
    %711 = vmatprep.subr.bf16.mxu0 0
    %712 = vmatpush1.bf16.msra.mxu0 %v665
    %713 = vmatprep.subr.bf16.mxu0 0
    %714 = vmatpush2.bf16.msra.mxu0 %v680
    %715 = vmatprep.subr.bf16.mxu0 0
    %716 = vmatpush2.bf16.msra.mxu0 %v679
    %717 = vmatprep.subr.bf16.mxu0 0
    %718 = vmatpush2.bf16.msra.mxu0 %v678
    %719 = vmatprep.subr.bf16.mxu0 0
    %720 = vmatpush2.bf16.msra.mxu0 %v677
    %721 = vmatprep.subr.bf16.mxu0 0
    %722 = vmatpush2.bf16.msra.mxu0 %v676
    %723 = vmatprep.subr.bf16.mxu0 0
    %724 = vmatpush2.bf16.msra.mxu0 %v675
    %725 = vmatprep.subr.bf16.mxu0 0
    %726 = vmatpush2.bf16.msra.mxu0 %v674
    %727 = vmatprep.subr.bf16.mxu0 0
    %728 = vmatpush2.bf16.msra.mxu0 %v673
    %729 = vmatprep.mubr.bf16.mxu0 %v559
    %730 = vmatmul.mubr.bf16.gmra.mxu0 %v517
    %v731 = vpop.f32.mrf.mxu0
    %v732 = vadd.f32 %v599, %v731
    %v733 = vpop.f32.mrf.mxu0
    %v734 = vpop.f32.mrf.mxu0
    %v735 = vadd.f32 %v599, %v734
    %v736 = vpop.f32.mrf.mxu0
    %737 = vdwg.mxu0
    %738 = vst [vmem:[#allocation8] sm:$0xff] %v732
    %739 = vst [vmem:[#allocation8 + $0x8] sm:$0xff] %v735
    // Predicated region
    $region30: #{tpu_custom_call.1} parent=1 // pred_check
      _
    $region31: #{tpu_custom_call.1} parent=1 // pred_check_branch
      %741 = sbr.rel (0) target = $region33
    $region32: #{tpu_custom_call.1} parent=1 // pred_region
      %s743 = ssub.s32 256, 256
      %744 = vsyncadd [#allocation4], %s743
      %s745 = sshll.u32 [#allocation8], 4
      %s746 = int_to_ptr.vmem [resolvable:$true] %s745
      %751 = dma.vmem_to_hbm [thread:$0]  %s746, 256, %s4, [#allocation4], 128, 128, 8
    $region33: #{tpu_custom_call.1} parent=1 // pred_fallthru
      _
    // Predicated region
    $region34: #{tpu_custom_call.1} parent=1 // pred_check
      _
    $region35: #{tpu_custom_call.1} parent=1 // pred_check_branch
      %753 = sbr.rel (0) target = $region37
    $region36: #{tpu_custom_call.1} parent=1 // pred_region
      %754 = dma.done [#allocation4], 256
    $region37: #{tpu_custom_call.1} parent=1 // pred_fallthru
      _
    %755 = vsyncpa [#allocation3], 1
    %756 = vsyncpa [#allocation6], 1
    %757 = vsyncpa [#allocation4], 1

</llo_original>
